<compile_context>
chip_gen: v5e
topology: v5e:2x2
jax: 0.10.0
libtpu: 0.0.40
codegen_flags: <defaults>
</compile_context>

<pallas_src>
import functools

import jax
import jax.numpy as jnp
from jax.experimental import pallas as pl
from jax.experimental.pallas import tpu as pltpu


def _pooling_kernel(x_ref, o_ref, sum_ref, max_ref, *, inv_len):
    """Grid: (batch_blocks, len_blocks). The len axis is a reduction."""
    l = pl.program_id(1)

    @pl.when(l == 0)
    def _init():
        sum_ref[...] = jnp.zeros_like(sum_ref)
        max_ref[...] = jnp.full_like(max_ref, -jnp.inf)

    # (TB, TL, H) tile; accumulate in float32 regardless of input dtype.
    x = x_ref[...].astype(jnp.float32)
    sum_ref[...] = sum_ref[...] + jnp.sum(x, axis=1)
    max_ref[...] = jnp.maximum(max_ref[...], jnp.max(x, axis=1))

    @pl.when(l == pl.num_programs(1) - 1)
    def _finalize():
        v_ave = sum_ref[...] * inv_len               # multiply by 1/L (full L)
        out = jnp.concatenate([v_ave, max_ref[...]], axis=-1)  # (TB, 2H)
        o_ref[...] = out.astype(o_ref.dtype)         # single dense store


def _choose_tiles(B, L, H, itemsize, target_bytes):
    """Pick (TB, TL) so the input tile is ~target_bytes and layout-friendly."""
    sub = 8 if itemsize >= 4 else 16          # sublane packing (f32 vs bf16)
    row_bytes = L * H * itemsize              # one batch row, full sequence

    if row_bytes <= target_bytes:
        # Whole sequence in one block; batch-block as many rows as fit.
        TL = L
        TB = min(B, max(1, target_bytes // row_bytes))
        if TB >= 2 * sub:
            TB = (TB // sub) * sub            # keep sublane-dense blocks
        # Leave >=2 batch blocks for 2-TC chips when the batch is big enough.
        if B > 2 * sub and TB >= B:
            TB = min(B, (((B + 1) // 2 + sub - 1) // sub) * sub)
    else:
        # Long sequence: tile L with an accumulator. TL must divide L (so no
        # padded garbage enters the reduction) and be a sublane multiple.
        TB = min(B, sub)
        max_tl = max(sub, target_bytes // max(1, TB * H * itemsize))
        divisors = [d for d in range(sub, min(L, max_tl) + 1, sub) if L % d == 0]
        TL = max(divisors) if divisors else L
    return TB, TL


def pooling_layer(x, *, target_block_bytes=2 << 20):
    """x: [B, L, H] -> [B, 2H] (avg-pool | max-pool over L)."""
    B, L, H = x.shape
    TB, TL = _choose_tiles(B, L, H, x.dtype.itemsize, target_block_bytes)
    grid = (pl.cdiv(B, TB), pl.cdiv(L, TL))
    # Note: if B % TB != 0 the padded rows in the last batch block produce
    # garbage rows that are never written back to HBM (per-row reductions),
    # so results stay correct.

    kernel = functools.partial(_pooling_kernel, inv_len=float(1.0 / L))

    return pl.pallas_call(
        kernel,
        out_shape=jax.ShapeDtypeStruct((B, 2 * H), x.dtype),
        grid_spec=pltpu.PrefetchScalarGridSpec(
            num_scalar_prefetch=0,
            grid=grid,
            in_specs=[pl.BlockSpec((TB, TL, H), lambda b, l: (b, l, 0))],
            out_specs=pl.BlockSpec((TB, 2 * H), lambda b, l: (b, 0)),
            scratch_shapes=[
                pltpu.VMEM((TB, H), jnp.float32),   # running sum
                pltpu.VMEM((TB, H), jnp.float32),   # running max
            ],
        ),
        compiler_params=pltpu.CompilerParams(
            dimension_semantics=("parallel", "arbitrary"),
            vmem_limit_bytes=48 * 1024 * 1024,      # safe on v5e/v6e/v7x
        ),
    )(x)


def pooling_layer_ref(x):
    """Pure-JAX reference matching the PyTorch module."""
    v_ave = jnp.sum(x, axis=1) / x.shape[1]
    v_max = jnp.max(x, axis=1)
    return jnp.concatenate((v_ave, v_max), axis=-1)


if __name__ == "__main__":
    # Small shapes consistent with the module: batch=2, seq len=8,
    # hidden_size=32 -> hidden_size*2 = 64 features. At this size the tile
    # chooser collapses to a single grid step over the whole array.
    B, L, H = 2, 8, 64
    key = jax.random.PRNGKey(0)
    x = jax.random.normal(key, (B, L, H), dtype=jnp.float32)

    out = pooling_layer(x)
    out = jax.block_until_ready(out)

    ref = pooling_layer_ref(x)
    assert out.shape == (B, 2 * H), out.shape
    assert jnp.allclose(out, ref, atol=1e-5, rtol=1e-5), "mismatch vs reference"

    print("KERNEL_OK")
</pallas_src>

<mosaic_0001>
module attributes {stable_mosaic.version = 11 : i64} {
  func.func @_pooling_kernel(%arg0: i32, %arg1: i32, %arg2: memref<2x8x64xf32, #tpu.memory_space<vmem>>, %arg3: memref<2x128xf32, #tpu.memory_space<vmem>>, %arg4: memref<2x64xf32, #tpu.memory_space<vmem>>, %arg5: memref<2x64xf32, #tpu.memory_space<vmem>>) attributes {dimension_semantics = [#tpu.dimension_semantics<parallel>, #tpu.dimension_semantics<arbitrary>], iteration_bounds = array<i64: 1, 1>, scalar_prefetch = 0 : i64, scratch_operands = 2 : i64, tpu.core_type = #tpu.core_type<tc>, window_params = [{transform_indices = @transform_0, window_bounds = array<i64: 2, 8, 64>}, {transform_indices = @transform_1, window_bounds = array<i64: 2, 128>}]} {
    %c0_i32 = arith.constant 0 : i32
    %0 = arith.cmpi eq, %arg1, %c0_i32 : i32
    %1 = arith.extui %0 : i1 to i32
    %c0_i32_0 = arith.constant 0 : i32
    %2 = arith.cmpi ne, %1, %c0_i32_0 : i32
    scf.if %2 {
      %cst_14 = arith.constant 0.000000e+00 : f32
      %15 = vector.broadcast %cst_14 : f32 to vector<2x64xf32>
      %c0_15 = arith.constant 0 : index
      %c0_16 = arith.constant 0 : index
      %16 = vector.load %arg4[%c0_15, %c0_16] : memref<2x64xf32, #tpu.memory_space<vmem>>, vector<2x64xf32>
      tpu.vector_store %arg4[%c0_15, %c0_16], %15 {strides = array<i32>} : memref<2x64xf32, #tpu.memory_space<vmem>>, vector<2x64xf32>,
      %cst_17 = arith.constant 0xFF800000 : f32
      %17 = vector.broadcast %cst_17 : f32 to vector<2x64xf32>
      %c0_18 = arith.constant 0 : index
      %c0_19 = arith.constant 0 : index
      %18 = vector.load %arg5[%c0_18, %c0_19] : memref<2x64xf32, #tpu.memory_space<vmem>>, vector<2x64xf32>
      tpu.vector_store %arg5[%c0_18, %c0_19], %17 {strides = array<i32>} : memref<2x64xf32, #tpu.memory_space<vmem>>, vector<2x64xf32>,
    } else {
    }
    %c0 = arith.constant 0 : index
    %c0_1 = arith.constant 0 : index
    %c0_2 = arith.constant 0 : index
    %3 = vector.load %arg2[%c0, %c0_1, %c0_2] : memref<2x8x64xf32, #tpu.memory_space<vmem>>, vector<2x8x64xf32>
    %c0_3 = arith.constant 0 : index
    %c0_4 = arith.constant 0 : index
    %4 = vector.load %arg4[%c0_3, %c0_4] : memref<2x64xf32, #tpu.memory_space<vmem>>, vector<2x64xf32>
    %cst = arith.constant dense<0.000000e+00> : vector<2x64xf32>
    %5 = vector.multi_reduction <add>, %3, %cst [1] : vector<2x8x64xf32> to vector<2x64xf32>
    %6 = arith.addf %4, %5 : vector<2x64xf32>
    %c0_5 = arith.constant 0 : index
    %c0_6 = arith.constant 0 : index
    %7 = vector.load %arg4[%c0_5, %c0_6] : memref<2x64xf32, #tpu.memory_space<vmem>>, vector<2x64xf32>
    tpu.vector_store %arg4[%c0_5, %c0_6], %6 {strides = array<i32>} : memref<2x64xf32, #tpu.memory_space<vmem>>, vector<2x64xf32>,
    %c0_7 = arith.constant 0 : index
    %c0_8 = arith.constant 0 : index
    %8 = vector.load %arg5[%c0_7, %c0_8] : memref<2x64xf32, #tpu.memory_space<vmem>>, vector<2x64xf32>
    %cst_9 = arith.constant dense<0xFF800000> : vector<2x64xf32>
    %9 = vector.multi_reduction <maximumf>, %3, %cst_9 [1] : vector<2x8x64xf32> to vector<2x64xf32>
    %10 = arith.maximumf %8, %9 : vector<2x64xf32>
    %c0_10 = arith.constant 0 : index
    %c0_11 = arith.constant 0 : index
    %11 = vector.load %arg5[%c0_10, %c0_11] : memref<2x64xf32, #tpu.memory_space<vmem>>, vector<2x64xf32>
    tpu.vector_store %arg5[%c0_10, %c0_11], %10 {strides = array<i32>} : memref<2x64xf32, #tpu.memory_space<vmem>>, vector<2x64xf32>,
    %c0_i32_12 = arith.constant 0 : i32
    %12 = arith.cmpi eq, %arg1, %c0_i32_12 : i32
    %13 = arith.extui %12 : i1 to i32
    %c0_i32_13 = arith.constant 0 : i32
    %14 = arith.cmpi ne, %13, %c0_i32_13 : i32
    scf.if %14 {
      %c0_14 = arith.constant 0 : index
      %c0_15 = arith.constant 0 : index
      %15 = vector.load %arg4[%c0_14, %c0_15] : memref<2x64xf32, #tpu.memory_space<vmem>>, vector<2x64xf32>
      %cst_16 = arith.constant 1.250000e-01 : f32
      %16 = vector.broadcast %cst_16 : f32 to vector<2x64xf32>
      %17 = arith.mulf %15, %16 : vector<2x64xf32>
      %c0_17 = arith.constant 0 : index
      %c0_18 = arith.constant 0 : index
      %18 = vector.load %arg5[%c0_17, %c0_18] : memref<2x64xf32, #tpu.memory_space<vmem>>, vector<2x64xf32>
      %19 = tpu.concatenate %17, %18 in 1 : vector<2x64xf32>, vector<2x64xf32> -> vector<2x128xf32>
      %c0_19 = arith.constant 0 : index
      %c0_20 = arith.constant 0 : index
      %20 = vector.load %arg3[%c0_19, %c0_20] : memref<2x128xf32, #tpu.memory_space<vmem>>, vector<2x128xf32>
      tpu.vector_store %arg3[%c0_19, %c0_20], %19 {strides = array<i32>} : memref<2x128xf32, #tpu.memory_space<vmem>>, vector<2x128xf32>,
    } else {
    }
    return
  }
  func.func @transform_0(%arg0: i32, %arg1: i32) -> (i32, i32, i32) {
    %c0_i32 = arith.constant 0 : i32
    %c0_i32_0 = arith.constant 0 : i32
    return %arg0, %arg1, %c0_i32 : i32, i32, i32
  }
  func.func @transform_1(%arg0: i32, %arg1: i32) -> (i32, i32) {
    %c0_i32 = arith.constant 0 : i32
    %c0_i32_0 = arith.constant 0 : i32
    return %arg0, %c0_i32 : i32, i32
  }
}

</mosaic_0001>

<llo_original>
// kernel: tpu_custom_call.1
$region0: #{tpu_custom_call.1}
  #allocation0 [shape = 'u32[]', space=smem, size = 0x4, offset = 0x4, fixed_abs, tag = 'smem constant byte address 0x4 - core index']
  #allocation1 [shape = 'u32[72,128]{1,0:T(1,128)}', space=vmem, size = 0x9000, scoped, tag = 'internal scratch']
  #allocation2 [shape = 'f32[2,64]{1,0:T(2,128)}', space=vmem, size = 0x400, scoped, tag = 'scratch operand']
  #allocation3 [shape = 'f32[2,64]{1,0:T(2,128)}', space=vmem, size = 0x400, scoped, tag = 'scratch operand']
  %s0 = inlined_call_operand.hbm [shape: f32[2,8,64], index: 0, kind: input, shape index: {}]
  %s1 = inlined_call_operand.hbm [shape: f32[2,128], index: 1, kind: output, shape index: {}]
  %s2 = sld [smem:[#allocation0]]
  $region26: #{tpu_custom_call.1} parent=0
    _
  %s4 = ssub.s32 1, %s2
  %s5 = scalar_select 0, %s4, %s2
  $region1: #{tpu_custom_call.1} parent=0
    #allocation4 [shape = 'u8[8192]{0}', space=vmem, size = 0x2000, scoped, tag = 'input window, operand 0, single buffered']
    #allocation5 [shape = 's32[1]{0}', space=sflag, size = 0x4, scoped, tag = 'scoped memory for tpu_custom_call.1']
    #allocation6 [shape = 's32[1]{0}', space=sflag, size = 0x4, scoped, tag = 'scoped memory for tpu_custom_call.1']
    #allocation7 [shape = 'u8[1024]{0}', space=vmem, size = 0x400, scoped, tag = 'output window, operand 0, single buffered']
    %6 = vsyncpa [#allocation5], 0
    %7 = vsyncpa [#allocation6], 0
    // Predicated region
    $region2: #{tpu_custom_call.1} parent=1 // pred_check
      _
    $region3: #{tpu_custom_call.1} parent=1 // pred_check_branch
      %9 = sbr.rel (0) target = $region5
    $region4: #{tpu_custom_call.1} parent=1 // pred_region
      %11 = vsyncadd [#allocation5], 0
      %s12 = sshll.u32 %s0, 4
      %s13 = int_to_ptr.hbm [resolvable:$true] %s12
      %s14 = sshll.u32 [#allocation4], 4
      %s15 = int_to_ptr.vmem [resolvable:$true] %s14
      %20 = dma.hbm_to_vmem [thread:$0]  %s13, 256, %s15, [#allocation5], 128, 128, 8
    $region5: #{tpu_custom_call.1} parent=1 // pred_fallthru
      _
    // Predicated region
    $region6: #{tpu_custom_call.1} parent=1 // pred_check
      _
    $region7: #{tpu_custom_call.1} parent=1 // pred_check_branch
      %22 = sbr.rel (0) target = $region9
    $region8: #{tpu_custom_call.1} parent=1 // pred_region
      %24 = dma.done [#allocation5], 256
    $region9: #{tpu_custom_call.1} parent=1 // pred_fallthru
      _
    %p25 = scmp.eq.s32.totalorder 0, 0
    // Predicated region
    $region10: #{tpu_custom_call.1} parent=1 // pred_check
      %p26 = pneg %p25
    $region11: #{tpu_custom_call.1} parent=1 // pred_check_branch
      %28 = sbr.rel (%p26) target = $region13
    $region12: #{tpu_custom_call.1} parent=1 // pred_region
      %vm29 = vcmask 517120
      %30 = vst.msk [vmem:[#allocation2] sm:$0x3] %vm29, 0.0
      %31 = vst.msk [vmem:[#allocation3] sm:$0x3] %vm29, -inf
    $region13: #{tpu_custom_call.1} parent=1 // pred_fallthru
      _
    %v32 = vld [vmem:[#allocation4] sm:$0xff]
    %v33 = vld [vmem:[#allocation4 + $0x8] sm:$0xff]
    %v34 = vld [vmem:[#allocation2] sm:$0x3]
    %vm35 = vcmask 523264
    %v36 = vsel %vm35, %v32, 0.0
    %v37 = vrot.slane %v36, 4
    %v38 = vadd.f32 %v36, %v37
    %v39 = vrot.slane %v38, 2
    %v40 = vadd.f32 %v38, %v39
    %v41 = vrot.slane %v40, 1
    %v42 = vadd.f32 %v40, %v41
    %v43 = vsel %vm35, %v33, 0.0
    %v44 = vrot.slane %v43, 4
    %v45 = vadd.f32 %v43, %v44
    %v46 = vrot.slane %v45, 2
    %v47 = vadd.f32 %v45, %v46
    %v48 = vrot.slane %v47, 1
    %v49 = vadd.f32 %v47, %v48
    %vm52 = vcmask 1041409
    %v53 = vsel %vm52, %v49, %v42
    %v55 = vadd.f32 %v34, %v53
    %vm56 = vcmask 517120
    %57 = vst.msk [vmem:[#allocation2] sm:$0x3] %vm56, %v55
    %v58 = vld [vmem:[#allocation3] sm:$0x3]
    %v59 = vsel %vm35, %v32, -inf
    %v60 = vrot.slane %v59, 4
    %v61 = vmax.f32 %v59, %v60
    %v62 = vrot.slane %v61, 2
    %v63 = vmax.f32 %v61, %v62
    %v64 = vrot.slane %v63, 1
    %v65 = vmax.f32 %v63, %v64
    %v66 = vsel %vm35, %v33, -inf
    %v67 = vrot.slane %v66, 4
    %v68 = vmax.f32 %v66, %v67
    %v69 = vrot.slane %v68, 2
    %v70 = vmax.f32 %v68, %v69
    %v71 = vrot.slane %v70, 1
    %v72 = vmax.f32 %v70, %v71
    %v75 = vsel %vm52, %v72, %v65
    %v77 = vmax.f32 %v58, %v75
    %78 = vst.msk [vmem:[#allocation3] sm:$0x3] %vm56, %v77
    // Predicated region
    $region14: #{tpu_custom_call.1} parent=1 // pred_check
      %p79 = pneg %p25
    $region15: #{tpu_custom_call.1} parent=1 // pred_check_branch
      %81 = sbr.rel (%p79) target = $region17
    $region16: #{tpu_custom_call.1} parent=1 // pred_region
      %v82 = vld [vmem:[#allocation2] sm:$0x3]
      %v83 = vmul.f32 %v82, 0.125
      %v84 = vld [vmem:[#allocation3] sm:$0x3]
      %86 = vrot.lane.b32.xlu0 %v84, 64
      %v87 = vpop.permute.xlu0 %86
      %v89 = vsel %vm35, %v83, %v87
      %90 = vst [vmem:[#allocation7] sm:$0x3] %v89
    $region17: #{tpu_custom_call.1} parent=1 // pred_fallthru
      _
    // Predicated region
    $region18: #{tpu_custom_call.1} parent=1 // pred_check
      _
    $region19: #{tpu_custom_call.1} parent=1 // pred_check_branch
      %92 = sbr.rel (0) target = $region21
    $region20: #{tpu_custom_call.1} parent=1 // pred_region
      %94 = vsyncadd [#allocation6], 0
      %s96 = sshll.u32 [#allocation7], 4
      %s97 = int_to_ptr.vmem [resolvable:$true] %s96
      %s98 = sshll.u32 %s1, 4
      %s99 = int_to_ptr.hbm [resolvable:$true] %s98
      %101 = dma.vmem_to_hbm [thread:$0]  %s97, 32, %s99, [#allocation6]
    $region21: #{tpu_custom_call.1} parent=1 // pred_fallthru
      _
    // Predicated region
    $region22: #{tpu_custom_call.1} parent=1 // pred_check
      _
    $region23: #{tpu_custom_call.1} parent=1 // pred_check_branch
      %103 = sbr.rel (0) target = $region25
    $region24: #{tpu_custom_call.1} parent=1 // pred_region
      %105 = dma.done [#allocation6], 32
    $region25: #{tpu_custom_call.1} parent=1 // pred_fallthru
      _
    %106 = vsyncpa [#allocation5], 1
    %107 = vsyncpa [#allocation6], 1

</llo_original>
